<compile_context>
chip_gen: v7x
topology: tpu7x:2x2x1
jax: 0.10.0
libtpu: 0.0.40
codegen_flags: <defaults>
</compile_context>

<pallas_src>
import functools

import jax
import jax.numpy as jnp
from jax.experimental import pallas as pl
from jax.experimental.pallas import tpu as pltpu


# ----------------------------------------------------------------------------
# Generation-aware VMEM budget.
# ----------------------------------------------------------------------------
@functools.lru_cache(maxsize=1)
def _tpu_vmem_limit_bytes() -> int:
    phys = None
    try:
        phys = getattr(pltpu.get_tpu_info(), "vmem_capacity_bytes", None)
    except Exception:  # pragma: no cover - info query is best-effort
        phys = None
    if phys is None:
        phys = 64 * 1024 * 1024            # assume the tightest generation (v7x)
    if phys >= 96 * 1024 * 1024:           # v5e / v6e: 128 MiB physical VMEM
        return 64 * 1024 * 1024
    return 32 * 1024 * 1024                # v7x: 64 MiB physical VMEM


def _attn_vmem_bytes(td, ts, hfo, num_heads, out_itemsize):
    """Rough VMEM model for one attention-kernel step (double-buffered I/O)."""
    streamed = 2 * (td * ts * 1            # adj tile, int8
                    + ts * hfo * 2         # z src tile, bf16
                    + num_heads * ts * 4   # el^T src tile, f32
                    + td * num_heads * 4   # er dst tile, f32
                    + td * hfo * out_itemsize)   # output tile
    scratch = td * (2 * num_heads + hfo) * 4     # running max / denom / acc
    temps = 4 * td * ts * 4                # live (Td, Ts) f32 temporaries
    return streamed + scratch + temps + (1 << 20)   # misc slack


def _pick_src_tile(n_src):
    if n_src <= 512:
        return n_src
    for c in (1024, 512, 256, 128):
        if n_src % c == 0:
            return c
    return n_src


def _pick_dst_tile(n_dst, tile_src, hfo, num_heads, out_itemsize, budget):
    # Multiples of 32 keep the int8 adjacency tile sublane-aligned.
    for c in (1024, 512, 256, 128, 64, 32):
        if n_dst % c == 0 and _attn_vmem_bytes(
                c, tile_src, hfo, num_heads, out_itemsize) <= budget:
            return c
    return n_dst


def _pick_row_tile(n):
    for c in (512, 256, 128, 64, 32, 16, 8):
        if n % c == 0:
            return c
    return n


# ----------------------------------------------------------------------------
# Kernel 1: projection z = feat @ W  and attention scores [el | er] = z @ A.
# ----------------------------------------------------------------------------
def _project_kernel(feat_ref, w_ref, attn_ref, z_ref, s_ref):
    # bf16 MXU operands, f32 accumulation.
    z = jnp.dot(feat_ref[...].astype(jnp.bfloat16), w_ref[...],
                preferred_element_type=jnp.float32)            # (Tn, H*Fo) f32
    # Lane-dense MXU matmul against the block-diagonal attention matrix
    # replaces H narrow (Fo=8-lane) VPU multiply-reduces.
    s_ref[...] = jnp.dot(z, attn_ref[...],
                         preferred_element_type=jnp.float32)    # (Tn, 2H) f32
    z_ref[...] = z.astype(jnp.bfloat16)                         # stored once in bf16


def _project(feat, w_bf16, attn_mat, hfo, two_h, tile_rows=None):
    n, fin = feat.shape
    if tile_rows is None:
        tile_rows = _pick_row_tile(n)
    assert n % tile_rows == 0, (n, tile_rows)
    grid = (n // tile_rows,)
    return pl.pallas_call(
        _project_kernel,
        out_shape=(jax.ShapeDtypeStruct((n, hfo), jnp.bfloat16),
                   jax.ShapeDtypeStruct((n, two_h), jnp.float32)),
        grid=grid,
        in_specs=[
            pl.BlockSpec((tile_rows, fin), lambda i: (i, 0)),   # feat rows (tiled)
            pl.BlockSpec((fin, hfo), lambda i: (0, 0)),         # W (resident, bf16)
            pl.BlockSpec((hfo, two_h), lambda i: (0, 0)),       # block-diag attn A
        ],
        out_specs=(pl.BlockSpec((tile_rows, hfo), lambda i: (i, 0)),
                   pl.BlockSpec((tile_rows, two_h), lambda i: (i, 0))),
        compiler_params=pltpu.CompilerParams(
            dimension_semantics=("parallel",),
            vmem_limit_bytes=_tpu_vmem_limit_bytes(),
        ),
    )(feat, w_bf16, attn_mat)


# ----------------------------------------------------------------------------
# Kernel 2: flash-style edge softmax + aggregation over (dst tile, src tile).
# ----------------------------------------------------------------------------
def _gat_attn_kernel(z_ref, elt_ref, er_ref, adj_ref, b_ref, out_ref,
                     m_sc, l_sc, acc_sc, *, num_heads: int, out_feats: int,
                     apply_relu: bool):
    j = pl.program_id(1)
    nj = pl.num_programs(1)

    @pl.when(j == 0)
    def _():
        m_sc[...] = jnp.full(m_sc.shape, -1e30, dtype=jnp.float32)
        l_sc[...] = jnp.zeros(l_sc.shape, dtype=jnp.float32)
        acc_sc[...] = jnp.zeros(acc_sc.shape, dtype=jnp.float32)

    # Per-step operands.
    edge = adj_ref[...].astype(jnp.float32) > 0.0        # (Td, Ts) bool
    z_src = z_ref[...]                                    # (Ts, H*Fo) bf16
    er = er_ref[...]                                      # (Td, H)  f32
    elt = elt_ref[...]                                    # (H, Ts)  f32

    m_old = m_sc[...]                                     # (Td, H)
    l_old = l_sc[...]                                     # (Td, H)
    acc_old = acc_sc[...]                                 # (Td, H*Fo)

    m_parts, l_parts, acc_parts = [], [], []
    for h in range(num_heads):                            # static unroll, H <= 4
        lo = h * out_feats
        # e[v, u] = leaky_relu(er[v] + el[u], 0.2), masked to edges.
        e = er[:, h:h + 1] + elt[h:h + 1, :]              # (Td, Ts)
        e = jnp.where(e > 0, e, 0.2 * e)
        e_masked = jnp.where(edge, e, jnp.float32(-1e30))

        # Online softmax update (per head): running max / denom / accumulator.
        m_h_old = m_old[:, h:h + 1]                       # (Td, 1)
        m_h = jnp.maximum(m_h_old, jnp.max(e_masked, axis=1, keepdims=True))
        corr = jnp.exp(m_h_old - m_h)                     # (Td, 1)
        # Multiplicative edge mask on the numerator: dst rows with zero edges
        # keep l == 0 and acc == 0 (bias-only output), never uniform attention.
        p = jnp.where(edge, jnp.exp(e_masked - m_h), jnp.float32(0.0))

        l_h = corr * l_old[:, h:h + 1] + jnp.sum(p, axis=1, keepdims=True)
        pv = jnp.dot(p.astype(jnp.bfloat16), z_src[:, lo:lo + out_feats],
                     preferred_element_type=jnp.float32)  # (Td, Fo)
        acc_h = corr * acc_old[:, lo:lo + out_feats] + pv

        m_parts.append(m_h)
        l_parts.append(l_h)
        acc_parts.append(acc_h)

    m_new = m_parts[0] if num_heads == 1 else jnp.concatenate(m_parts, axis=-1)
    l_new = l_parts[0] if num_heads == 1 else jnp.concatenate(l_parts, axis=-1)
    acc_new = acc_parts[0] if num_heads == 1 else jnp.concatenate(acc_parts, axis=-1)

    m_sc[...] = m_new
    l_sc[...] = l_new
    acc_sc[...] = acc_new

    @pl.when(j == nj - 1)
    def _():
        outs = []
        for h in range(num_heads):
            lo = h * out_feats
            l_h = l_new[:, h:h + 1]
            inv = jnp.where(l_h > 0,
                            pl.reciprocal(jnp.maximum(l_h, 1e-30), approx=True),
                            jnp.float32(0.0))
            outs.append(acc_new[:, lo:lo + out_feats] * inv)
        out = outs[0] if num_heads == 1 else jnp.concatenate(outs, axis=-1)
        out = out + b_ref[...]
        if apply_relu:
            out = jnp.maximum(out, 0.0)
        out_ref[...] = out.astype(out_ref.dtype)          # one full-width store


def _attention(z, el_t, er, adj, bias, *, num_heads, out_feats, apply_relu,
               out_dtype, tile_dst, tile_src):
    n_dst, n_src = adj.shape
    hfo = num_heads * out_feats
    grid = (n_dst // tile_dst, n_src // tile_src)
    kernel = functools.partial(_gat_attn_kernel, num_heads=num_heads,
                               out_feats=out_feats, apply_relu=apply_relu)
    return pl.pallas_call(
        kernel,
        out_shape=jax.ShapeDtypeStruct((n_dst, hfo), out_dtype),
        grid=grid,
        in_specs=[
            pl.BlockSpec((tile_src, hfo), lambda i, j: (j, 0)),        # z (bf16)
            pl.BlockSpec((num_heads, tile_src), lambda i, j: (0, j)),  # el^T
            pl.BlockSpec((tile_dst, num_heads), lambda i, j: (i, 0)),  # er
            pl.BlockSpec((tile_dst, tile_src), lambda i, j: (i, j)),   # adj (int8)
            pl.BlockSpec((1, hfo), lambda i, j: (0, 0)),               # bias
        ],
        out_specs=pl.BlockSpec((tile_dst, hfo), lambda i, j: (i, 0)),
        scratch_shapes=[
            pltpu.VMEM((tile_dst, num_heads), jnp.float32),   # running max
            pltpu.VMEM((tile_dst, num_heads), jnp.float32),   # running denom
            pltpu.VMEM((tile_dst, hfo), jnp.float32),         # running accumulator
        ],
        compiler_params=pltpu.CompilerParams(
            dimension_semantics=("parallel", "arbitrary"),    # dst || , src reduce
            vmem_limit_bytes=_tpu_vmem_limit_bytes(),
        ),
    )(z, el_t, er, adj, bias)


# ----------------------------------------------------------------------------
# Layer / model wrappers.
# ----------------------------------------------------------------------------
def _build_attn_matrix(attn_l, attn_r):
    """(H*Fo, 2H) block-diagonal matrix so [el | er] = z @ A in one MXU matmul."""
    num_heads, out_feats = attn_l.shape
    eye = jnp.eye(num_heads, dtype=jnp.float32)
    a_l = (attn_l[:, :, None] * eye[:, None, :]).reshape(num_heads * out_feats,
                                                         num_heads)
    a_r = (attn_r[:, :, None] * eye[:, None, :]).reshape(num_heads * out_feats,
                                                         num_heads)
    return jnp.concatenate([a_l, a_r], axis=1)


def gat_layer(feat, adj, params, *, apply_relu, out_dtype=jnp.float32,
              tile_dst=None, tile_src=None, tile_rows=None):
    num_heads = params["num_heads"]
    out_feats = params["out_feats"]
    hfo = num_heads * out_feats
    n_dst, n_src = adj.shape
    # TODO(synk): assumes the dst and src node sets are identical (full-graph
    # block); a real DGL block with a distinct dst set needs a separate dst er.
    assert feat.shape[0] == n_src == n_dst, (feat.shape, adj.shape)

    w_bf16 = params["w"].astype(jnp.bfloat16)
    attn_mat = _build_attn_matrix(params["attn_l"], params["attn_r"])

    # Kernel 1: projection + attention scores, once per layer.
    z, scores = _project(feat, w_bf16, attn_mat, hfo, 2 * num_heads, tile_rows)
    el_t = jnp.transpose(scores[:, :num_heads])          # (H, N) — tiny XLA glue
    er = scores[:, num_heads:]                           # (N, H)
    bias = params["bias"].reshape(1, hfo)

    if tile_src is None:
        tile_src = _pick_src_tile(n_src)
    if tile_dst is None:
        budget = int(_tpu_vmem_limit_bytes() * 0.85)
        tile_dst = _pick_dst_tile(n_dst, tile_src, hfo, num_heads,
                                  jnp.dtype(out_dtype).itemsize, budget)
    assert n_dst % tile_dst == 0 and n_src % tile_src == 0, (tile_dst, tile_src)

    # Kernel 2: flash-style edge softmax + aggregation.
    return _attention(z, el_t, er, adj, bias, num_heads=num_heads,
                      out_feats=out_feats, apply_relu=apply_relu,
                      out_dtype=out_dtype, tile_dst=tile_dst, tile_src=tile_src)


def init_gat_params(key, in_feats, out_feats, num_heads):
    k1, k2, k3 = jax.random.split(key, 3)
    w = jax.random.normal(k1, (in_feats, num_heads * out_feats), jnp.float32) * 0.1
    attn_l = jax.random.normal(k2, (num_heads, out_feats), jnp.float32) * 0.1
    attn_r = jax.random.normal(k3, (num_heads, out_feats), jnp.float32) * 0.1
    bias = jnp.zeros((num_heads * out_feats,), jnp.float32)
    return dict(w=w, attn_l=attn_l, attn_r=attn_r, bias=bias,
                num_heads=num_heads, out_feats=out_feats)


def gat_forward(blocks, feat, params_list, tile_dst=None, tile_src=None):
    """Mirrors Gat.forward: per-layer GATConv, ReLU+Dropout on non-last layers,
    flatten(1) after every layer (already flat in the (N, H*Fo) layout)."""
    hid = feat
    n_layers = len(params_list)
    for idx, (adj, p) in enumerate(zip(blocks, params_list)):
        is_last = idx == n_layers - 1
        out_dtype = jnp.float32 if is_last else jnp.bfloat16   # bf16 inter-layer
        hid = gat_layer(hid, adj, p, apply_relu=not is_last, out_dtype=out_dtype,
                        tile_dst=tile_dst, tile_src=tile_src)
        # TODO(synk): nn.Dropout()/attn_drop applied in eval mode (identity);
        # training-mode RNG dropout semantics are not reproduced here.
    return hid


# ----------------------------------------------------------------------------
# Pure-JAX f32 reference (DGL GATConv semantics) for validation.
# ----------------------------------------------------------------------------
def gat_forward_ref(blocks, feat, params_list):
    hid = feat.astype(jnp.float32)
    n_layers = len(params_list)
    for idx, (adj, p) in enumerate(zip(blocks, params_list)):
        num_heads, out_feats = p["num_heads"], p["out_feats"]
        z = hid @ p["w"]
        zh = z.reshape(-1, num_heads, out_feats)
        el = jnp.einsum("shf,hf->sh", zh, p["attn_l"])
        er = jnp.einsum("dhf,hf->dh", zh, p["attn_r"])
        e = er[:, None, :] + el[None, :, :]                   # (dst, src, H)
        e = jnp.where(e > 0, e, 0.2 * e)
        mask = (adj > 0)[:, :, None]
        e = jnp.where(mask, e, -jnp.inf)                      # self-loops guarantee edges
        alpha = jax.nn.softmax(e, axis=1)
        out = jnp.einsum("dsh,shf->dhf", alpha, zh).reshape(-1, num_heads * out_feats)
        out = out + p["bias"][None, :]
        if idx != n_layers - 1:
            out = jnp.maximum(out, 0.0)
        hid = out
    return hid


if __name__ == "__main__":
    key = jax.random.PRNGKey(0)

    # Gat(in_feats=48, hid_feats=32, num_layers=3, out_feats=8, num_heads=4)
    #   per-head hidden = 32 // 4 = 8
    #   L0: GATConv(48 -> 8, heads=4)   -> (N, 32)
    #   L1: GATConv(32 -> 8, heads=4)   -> (N, 32)
    #   L2: GATConv(32 -> 8, heads=1)   -> (N, 8)
    N = 256
    in_feats = 48
    hid_feats = 32
    num_layers = 3
    out_feats = 8
    num_heads = 4
    hid_per_head = hid_feats // num_heads

    keys = jax.random.split(key, 1 + 2 * num_layers)
    feat = jax.random.normal(keys[0], (N, in_feats), jnp.float32)

    def make_adj(k):
        a = jax.random.uniform(k, (N, N)) > 0.5
        a = jnp.logical_or(a, jnp.eye(N, dtype=bool))          # add self-loops
        return a.astype(jnp.int8)                              # int8 adjacency stream

    blocks = [make_adj(keys[1 + i]) for i in range(num_layers)]

    params_list = []
    layer_in = in_feats
    for li in range(num_layers):
        is_last = li == num_layers - 1
        h = 1 if is_last else num_heads
        fo = out_feats if is_last else hid_per_head
        params_list.append(init_gat_params(keys[1 + num_layers + li], layer_in, fo, h))
        layer_in = h * fo

    # tile_dst = tile_src = 128 -> attention grid (2, 2): exercises both the
    # dst-parallel axis and the online-softmax src ("arbitrary") axis.
    out = gat_forward(blocks, feat, params_list, tile_dst=128, tile_src=128)
    out = jax.block_until_ready(out)
    assert out.shape == (N, out_feats), out.shape
    assert bool(jnp.all(jnp.isfinite(out)))

    # Validate against the pure-JAX f32 reference (tolerance covers bf16 MXU
    # operands, bf16 inter-layer storage, and the approx EUP reciprocal).
    ref = gat_forward_ref(blocks, feat, params_list)
    max_err = float(jnp.max(jnp.abs(out.astype(jnp.float32) - ref)))
    assert max_err < 5e-2, f"max abs error vs f32 reference: {max_err}"

    print("KERNEL_OK")
</pallas_src>

<mosaic_0001>
module attributes {stable_mosaic.version = 11 : i64} {
  func.func @_project_kernel(%arg0: i32, %arg1: memref<256x48xf32, #tpu.memory_space<vmem>>, %arg2: memref<48x32xbf16, #tpu.memory_space<vmem>>, %arg3: memref<32x8xf32, #tpu.memory_space<vmem>>, %arg4: memref<256x32xbf16, #tpu.memory_space<vmem>>, %arg5: memref<256x8xf32, #tpu.memory_space<vmem>>) attributes {dimension_semantics = [#tpu.dimension_semantics<parallel>], iteration_bounds = array<i64: 1>, scalar_prefetch = 0 : i64, scratch_operands = 0 : i64, tpu.core_type = #tpu.core_type<tc>, window_params = [{transform_indices = @transform_0, window_bounds = array<i64: 256, 48>}, {pipeline_mode = #tpu.pipeline_mode<synchronous>, transform_indices = @transform_1, window_bounds = array<i64: 48, 32>}, {pipeline_mode = #tpu.pipeline_mode<synchronous>, transform_indices = @transform_2, window_bounds = array<i64: 32, 8>}, {transform_indices = @transform_3, window_bounds = array<i64: 256, 32>}, {transform_indices = @transform_4, window_bounds = array<i64: 256, 8>}]} {
    %c0 = arith.constant 0 : index
    %c0_0 = arith.constant 0 : index
    %0 = vector.load %arg1[%c0, %c0_0] : memref<256x48xf32, #tpu.memory_space<vmem>>, vector<256x48xf32>
    %1 = arith.truncf %0 : vector<256x48xf32> to vector<256x48xbf16>
    %c0_1 = arith.constant 0 : index
    %c0_2 = arith.constant 0 : index
    %2 = vector.load %arg2[%c0_1, %c0_2] : memref<48x32xbf16, #tpu.memory_space<vmem>>, vector<48x32xbf16>
    %cst = arith.constant dense<0.000000e+00> : vector<256x32xf32>
    %3 = tpu.matmul %1, %2, %cst {dimension_numbers = #tpu.dot_dimension_numbers<[1], [0], [0], [1], [0, 0, 1, 1], [], []>} : vector<256x48xbf16>, vector<48x32xbf16>, vector<256x32xf32> -> vector<256x32xf32>
    %c0_3 = arith.constant 0 : index
    %c0_4 = arith.constant 0 : index
    %4 = vector.load %arg3[%c0_3, %c0_4] : memref<32x8xf32, #tpu.memory_space<vmem>>, vector<32x8xf32>
    %cst_5 = arith.constant dense<0.000000e+00> : vector<256x8xf32>
    %5 = tpu.matmul %3, %4, %cst_5 {dimension_numbers = #tpu.dot_dimension_numbers<[1], [0], [0], [1], [0, 0, 1, 1], [], []>} : vector<256x32xf32>, vector<32x8xf32>, vector<256x8xf32> -> vector<256x8xf32>
    %c0_6 = arith.constant 0 : index
    %c0_7 = arith.constant 0 : index
    %6 = vector.load %arg5[%c0_6, %c0_7] : memref<256x8xf32, #tpu.memory_space<vmem>>, vector<256x8xf32>
    tpu.vector_store %arg5[%c0_6, %c0_7], %5 {strides = array<i32>} : memref<256x8xf32, #tpu.memory_space<vmem>>, vector<256x8xf32>,
    %7 = arith.truncf %3 : vector<256x32xf32> to vector<256x32xbf16>
    %c0_8 = arith.constant 0 : index
    %c0_9 = arith.constant 0 : index
    %8 = vector.load %arg4[%c0_8, %c0_9] : memref<256x32xbf16, #tpu.memory_space<vmem>>, vector<256x32xbf16>
    tpu.vector_store %arg4[%c0_8, %c0_9], %7 {strides = array<i32>} : memref<256x32xbf16, #tpu.memory_space<vmem>>, vector<256x32xbf16>,
    return
  }
  func.func @transform_0(%arg0: i32) -> (i32, i32) {
    %c0_i32 = arith.constant 0 : i32
    %c0_i32_0 = arith.constant 0 : i32
    return %arg0, %c0_i32 : i32, i32
  }
  func.func @transform_1(%arg0: i32) -> (i32, i32) {
    %c0_i32 = arith.constant 0 : i32
    %c0_i32_0 = arith.constant 0 : i32
    %c0_i32_1 = arith.constant 0 : i32
    return %c0_i32, %c0_i32_0 : i32, i32
  }
  func.func @transform_2(%arg0: i32) -> (i32, i32) {
    %c0_i32 = arith.constant 0 : i32
    %c0_i32_0 = arith.constant 0 : i32
    %c0_i32_1 = arith.constant 0 : i32
    return %c0_i32, %c0_i32_0 : i32, i32
  }
  func.func @transform_3(%arg0: i32) -> (i32, i32) {
    %c0_i32 = arith.constant 0 : i32
    %c0_i32_0 = arith.constant 0 : i32
    return %arg0, %c0_i32 : i32, i32
  }
  func.func @transform_4(%arg0: i32) -> (i32, i32) {
    %c0_i32 = arith.constant 0 : i32
    %c0_i32_0 = arith.constant 0 : i32
    return %arg0, %c0_i32 : i32, i32
  }
}

</mosaic_0001>

<llo_original>
// kernel: tpu_custom_call.1
$region0: #{tpu_custom_call.1}
  #allocation0 [shape = 'u32[]', space=smem, size = 0x4, offset = 0x4, fixed_abs, tag = 'smem constant byte address 0x4 - core index']
  #allocation1 [shape = 'u32[144,128]{1,0:T(1,128)}', space=vmem, size = 0x12000, scoped, tag = 'internal scratch']
  %s0 = inlined_call_operand.vmem [shape: f32[256,48], index: 0, kind: input, shape index: {}]
  %s1 = inlined_call_operand.vmem [shape: bf16[48,32], index: 1, kind: input, shape index: {}]
  %s2 = inlined_call_operand.vmem [shape: f32[32,8], index: 2, kind: input, shape index: {}]
  %s3 = inlined_call_operand.vmem [shape: bf16[256,32], index: 3, kind: output, shape index: {0}]
  %s4 = inlined_call_operand.vmem [shape: f32[256,8], index: 4, kind: output, shape index: {1}]
  %5 = xla_tuple %s3, %s4
  %s6 = sld [smem:[#allocation0]]
  $region30: #{tpu_custom_call.1} parent=0
    _
  %s8 = ssub.s32 1, %s6
  %s9 = scalar_select 0, %s8, %s6
  // Predicated region
  $region2: #{tpu_custom_call.1} parent=0 // pred_check
    _
  $region3: #{tpu_custom_call.1} parent=0 // pred_check_branch
    %11 = sbr.rel (0) target = $region5
  $region4: #{tpu_custom_call.1} parent=0 // pred_region
    _
  $region5: #{tpu_custom_call.1} parent=0 // pred_fallthru
    _
  // Predicated region
  $region6: #{tpu_custom_call.1} parent=0 // pred_check
    _
  $region7: #{tpu_custom_call.1} parent=0 // pred_check_branch
    %13 = sbr.rel (0) target = $region9
  $region8: #{tpu_custom_call.1} parent=0 // pred_region
    _
  $region9: #{tpu_custom_call.1} parent=0 // pred_fallthru
    _
  // Predicated region
  $region10: #{tpu_custom_call.1} parent=0 // pred_check
    _
  $region11: #{tpu_custom_call.1} parent=0 // pred_check_branch
    %15 = sbr.rel (0) target = $region13
  $region12: #{tpu_custom_call.1} parent=0 // pred_region
    _
  $region13: #{tpu_custom_call.1} parent=0 // pred_fallthru
    _
  %v17 = vld [vmem:[%s0] sm:$0xff]
  %v18 = vld [vmem:[%s0 + $0x8] sm:$0xff]
  %v19 = vld [vmem:[%s0 + $0x10] sm:$0xff]
  %v20 = vld [vmem:[%s0 + $0x18] sm:$0xff]
  %v21 = vld [vmem:[%s0 + $0x20] sm:$0xff]
  %v22 = vld [vmem:[%s0 + $0x28] sm:$0xff]
  %v23 = vld [vmem:[%s0 + $0x30] sm:$0xff]
  %v24 = vld [vmem:[%s0 + $0x38] sm:$0xff]
  %v25 = vld [vmem:[%s0 + $0x40] sm:$0xff]
  %v26 = vld [vmem:[%s0 + $0x48] sm:$0xff]
  %v27 = vld [vmem:[%s0 + $0x50] sm:$0xff]
  %v28 = vld [vmem:[%s0 + $0x58] sm:$0xff]
  %v29 = vld [vmem:[%s0 + $0x60] sm:$0xff]
  %v30 = vld [vmem:[%s0 + $0x68] sm:$0xff]
  %v31 = vld [vmem:[%s0 + $0x70] sm:$0xff]
  %v32 = vld [vmem:[%s0 + $0x78] sm:$0xff]
  %v33 = vld [vmem:[%s0 + $0x80] sm:$0xff]
  %v34 = vld [vmem:[%s0 + $0x88] sm:$0xff]
  %v35 = vld [vmem:[%s0 + $0x90] sm:$0xff]
  %v36 = vld [vmem:[%s0 + $0x98] sm:$0xff]
  %v37 = vld [vmem:[%s0 + $0xa0] sm:$0xff]
  %v38 = vld [vmem:[%s0 + $0xa8] sm:$0xff]
  %v39 = vld [vmem:[%s0 + $0xb0] sm:$0xff]
  %v40 = vld [vmem:[%s0 + $0xb8] sm:$0xff]
  %v41 = vld [vmem:[%s0 + $0xc0] sm:$0xff]
  %v42 = vld [vmem:[%s0 + $0xc8] sm:$0xff]
  %v43 = vld [vmem:[%s0 + $0xd0] sm:$0xff]
  %v44 = vld [vmem:[%s0 + $0xd8] sm:$0xff]
  %v45 = vld [vmem:[%s0 + $0xe0] sm:$0xff]
  %v46 = vld [vmem:[%s0 + $0xe8] sm:$0xff]
  %v47 = vld [vmem:[%s0 + $0xf0] sm:$0xff]
  %v48 = vld [vmem:[%s0 + $0xf8] sm:$0xff]
  %v49 = vpack.c.bf16 %v18, %v17
  %v50 = vpack.c.bf16 %v20, %v19
  %v51 = vpack.c.bf16 %v22, %v21
  %v52 = vpack.c.bf16 %v24, %v23
  %v53 = vpack.c.bf16 %v26, %v25
  %v54 = vpack.c.bf16 %v28, %v27
  %v55 = vpack.c.bf16 %v30, %v29
  %v56 = vpack.c.bf16 %v32, %v31
  %v57 = vpack.c.bf16 %v34, %v33
  %v58 = vpack.c.bf16 %v36, %v35
  %v59 = vpack.c.bf16 %v38, %v37
  %v60 = vpack.c.bf16 %v40, %v39
  %v61 = vpack.c.bf16 %v42, %v41
  %v62 = vpack.c.bf16 %v44, %v43
  %v63 = vpack.c.bf16 %v46, %v45
  %v64 = vpack.c.bf16 %v48, %v47
  %v65 = vld [vmem:[%s1] sm:$0xf]
  %v66 = vld [vmem:[%s1 + $0x4] sm:$0xf]
  %v67 = vld [vmem:[%s1 + $0x8] sm:$0xf]
  %v68 = vld [vmem:[%s1 + $0xc] sm:$0xf]
  %v69 = vld [vmem:[%s1 + $0x10] sm:$0xf]
  %v70 = vld [vmem:[%s1 + $0x14] sm:$0xf]
  %v77 = vunpack.c.l.b16 %v65
  %v78 = vunpack.c.l.b16 %v66
  %v79 = vunpack.c.l.b16 %v67
  %v80 = vunpack.c.l.b16 %v68
  %v81 = vunpack.c.l.b16 %v69
  %v82 = vunpack.c.l.b16 %v70
  %v83 = vpack.c.b16 %v78, %v77
  %v84 = vpack.c.b16 %v80, %v79
  %v85 = vpack.c.b16 %v82, %v81
  %vm89 = vcmask 392192
  %v91 = vsel %vm89, %v49, 0
  %v94 = vsel %vm89, %v50, 0
  %v97 = vsel %vm89, %v51, 0
  %v100 = vsel %vm89, %v52, 0
  %v103 = vsel %vm89, %v53, 0
  %v106 = vsel %vm89, %v54, 0
  %v109 = vsel %vm89, %v55, 0
  %v112 = vsel %vm89, %v56, 0
  %v115 = vsel %vm89, %v57, 0
  %v118 = vsel %vm89, %v58, 0
  %v121 = vsel %vm89, %v59, 0
  %v124 = vsel %vm89, %v60, 0
  %v127 = vsel %vm89, %v61, 0
  %v130 = vsel %vm89, %v62, 0
  %v133 = vsel %vm89, %v63, 0
  %v136 = vsel %vm89, %v64, 0
  %138 = vmatprep.subr.bf16.mxu0 0
  %139 = vmatpush1.bf16.msra.mxu0 %v83
  %140 = vmatprep.subr.bf16.mxu0 0
  %141 = vmatpush1.bf16.msra.mxu0 %v84
  %142 = vmatprep.subr.bf16.mxu0 0
  %143 = vmatpush1.bf16.msra.mxu0 %v85
  %144 = vmatprep.subr.bf16.mxu0 0
  %145 = vmatpush1.bf16.msra.mxu0 0
  %146 = vmatprep.subr.bf16.mxu0 0
  %147 = vmatpush1.bf16.msra.mxu0 0
  %148 = vmatprep.subr.bf16.mxu0 0
  %149 = vmatpush1.bf16.msra.mxu0 0
  %150 = vmatprep.subr.bf16.mxu0 0
  %151 = vmatpush1.bf16.msra.mxu0 0
  %152 = vmatprep.subr.bf16.mxu0 0
  %153 = vmatpush1.bf16.msra.mxu0 0
  %154 = vmatprep.subr.bf16.mxu0 0
  %155 = vmatpush1.bf16.msra.mxu0 0
  %156 = vmatprep.subr.bf16.mxu0 0
  %157 = vmatpush1.bf16.msra.mxu0 0
  %158 = vmatprep.subr.bf16.mxu0 0
  %159 = vmatpush1.bf16.msra.mxu0 0
  %160 = vmatprep.subr.bf16.mxu0 0
  %161 = vmatpush1.bf16.msra.mxu0 0
  %162 = vmatprep.subr.bf16.mxu0 0
  %163 = vmatpush1.bf16.msra.mxu0 0
  %164 = vmatprep.subr.bf16.mxu0 0
  %165 = vmatpush1.bf16.msra.mxu0 0
  %166 = vmatprep.subr.bf16.mxu0 0
  %167 = vmatpush1.bf16.msra.mxu0 0
  %168 = vmatprep.subr.bf16.mxu0 0
  %169 = vmatpush1.bf16.msra.mxu0 0
  %170 = vmatprep.mubr.bf16.mxu0 0
  %171 = vmatmul.mubr.bf16.gmra.mrb[0].mxu0 %v91
  %v172 = vpop.f32.mrb[0].mxu0
  %v173 = vadd.f32 0.0, %v172
  %v174 = vpop.f32.mrb[0].mxu0
  %v175 = vpop.f32.mrb[0].mxu0
  %v176 = vadd.f32 0.0, %v175
  %v177 = vpop.f32.mrb[0].mxu0
  %178 = vmatprep.mubr.bf16.mxu0 0
  %179 = vmatmul.mubr.bf16.gmra.mrb[0].mxu0 %v94
  %v180 = vpop.f32.mrb[0].mxu0
  %v181 = vadd.f32 0.0, %v180
  %v182 = vpop.f32.mrb[0].mxu0
  %v183 = vpop.f32.mrb[0].mxu0
  %v184 = vadd.f32 0.0, %v183
  %v185 = vpop.f32.mrb[0].mxu0
  %186 = vmatprep.mubr.bf16.mxu0 0
  %187 = vmatmul.mubr.bf16.gmra.mrb[0].mxu0 %v97
  %v188 = vpop.f32.mrb[0].mxu0
  %v189 = vadd.f32 0.0, %v188
  %v190 = vpop.f32.mrb[0].mxu0
  %v191 = vpop.f32.mrb[0].mxu0
  %v192 = vadd.f32 0.0, %v191
  %v193 = vpop.f32.mrb[0].mxu0
  %194 = vmatprep.mubr.bf16.mxu0 0
  %195 = vmatmul.mubr.bf16.gmra.mrb[0].mxu0 %v100
  %v196 = vpop.f32.mrb[0].mxu0
  %v197 = vadd.f32 0.0, %v196
  %v198 = vpop.f32.mrb[0].mxu0
  %v199 = vpop.f32.mrb[0].mxu0
  %v200 = vadd.f32 0.0, %v199
  %v201 = vpop.f32.mrb[0].mxu0
  %202 = vmatprep.mubr.bf16.mxu0 0
  %203 = vmatmul.mubr.bf16.gmra.mrb[0].mxu0 %v103
  %v204 = vpop.f32.mrb[0].mxu0
  %v205 = vadd.f32 0.0, %v204
  %v206 = vpop.f32.mrb[0].mxu0
  %v207 = vpop.f32.mrb[0].mxu0
  %v208 = vadd.f32 0.0, %v207
  %v209 = vpop.f32.mrb[0].mxu0
  %210 = vmatprep.mubr.bf16.mxu0 0
  %211 = vmatmul.mubr.bf16.gmra.mrb[0].mxu0 %v106
  %v212 = vpop.f32.mrb[0].mxu0
  %v213 = vadd.f32 0.0, %v212
  %v214 = vpop.f32.mrb[0].mxu0
  %v215 = vpop.f32.mrb[0].mxu0
  %v216 = vadd.f32 0.0, %v215
  %v217 = vpop.f32.mrb[0].mxu0
  %218 = vmatprep.mubr.bf16.mxu0 0
  %219 = vmatmul.mubr.bf16.gmra.mrb[0].mxu0 %v109
  %v220 = vpop.f32.mrb[0].mxu0
  %v221 = vadd.f32 0.0, %v220
  %v222 = vpop.f32.mrb[0].mxu0
  %v223 = vpop.f32.mrb[0].mxu0
  %v224 = vadd.f32 0.0, %v223
  %v225 = vpop.f32.mrb[0].mxu0
  %226 = vmatprep.mubr.bf16.mxu0 0
  %227 = vmatmul.mubr.bf16.gmra.mrb[0].mxu0 %v112
  %v228 = vpop.f32.mrb[0].mxu0
  %v229 = vadd.f32 0.0, %v228
  %v230 = vpop.f32.mrb[0].mxu0
  %v231 = vpop.f32.mrb[0].mxu0
  %v232 = vadd.f32 0.0, %v231
  %v233 = vpop.f32.mrb[0].mxu0
  %234 = vmatprep.mubr.bf16.mxu0 0
  %235 = vmatmul.mubr.bf16.gmra.mrb[0].mxu0 %v115
  %v236 = vpop.f32.mrb[0].mxu0
  %v237 = vadd.f32 0.0, %v236
  %v238 = vpop.f32.mrb[0].mxu0
  %v239 = vpop.f32.mrb[0].mxu0
  %v240 = vadd.f32 0.0, %v239
  %v241 = vpop.f32.mrb[0].mxu0
  %242 = vmatprep.mubr.bf16.mxu0 0
  %243 = vmatmul.mubr.bf16.gmra.mrb[0].mxu0 %v118
  %v244 = vpop.f32.mrb[0].mxu0
  %v245 = vadd.f32 0.0, %v244
  %v246 = vpop.f32.mrb[0].mxu0
  %v247 = vpop.f32.mrb[0].mxu0
  %v248 = vadd.f32 0.0, %v247
  %v249 = vpop.f32.mrb[0].mxu0
  %250 = vmatprep.mubr.bf16.mxu0 0
  %251 = vmatmul.mubr.bf16.gmra.mrb[0].mxu0 %v121
  %v252 = vpop.f32.mrb[0].mxu0
  %v253 = vadd.f32 0.0, %v252
  %v254 = vpop.f32.mrb[0].mxu0
  %v255 = vpop.f32.mrb[0].mxu0
  %v256 = vadd.f32 0.0, %v255
  %v257 = vpop.f32.mrb[0].mxu0
  %258 = vmatprep.mubr.bf16.mxu0 0
  %259 = vmatmul.mubr.bf16.gmra.mrb[0].mxu0 %v124
  %v260 = vpop.f32.mrb[0].mxu0
  %v261 = vadd.f32 0.0, %v260
  %v262 = vpop.f32.mrb[0].mxu0
  %v263 = vpop.f32.mrb[0].mxu0
  %v264 = vadd.f32 0.0, %v263
  %v265 = vpop.f32.mrb[0].mxu0
  %266 = vmatprep.mubr.bf16.mxu0 0
  %267 = vmatmul.mubr.bf16.gmra.mrb[0].mxu0 %v127
  %v268 = vpop.f32.mrb[0].mxu0
  %v269 = vadd.f32 0.0, %v268
  %v270 = vpop.f32.mrb[0].mxu0
  %v271 = vpop.f32.mrb[0].mxu0
  %v272 = vadd.f32 0.0, %v271
  %v273 = vpop.f32.mrb[0].mxu0
  %274 = vmatprep.mubr.bf16.mxu0 0
  %275 = vmatmul.mubr.bf16.gmra.mrb[0].mxu0 %v130
  %v276 = vpop.f32.mrb[0].mxu0
  %v277 = vadd.f32 0.0, %v276
  %v278 = vpop.f32.mrb[0].mxu0
  %v279 = vpop.f32.mrb[0].mxu0
  %v280 = vadd.f32 0.0, %v279
  %v281 = vpop.f32.mrb[0].mxu0
  %282 = vmatprep.mubr.bf16.mxu0 0
  %283 = vmatmul.mubr.bf16.gmra.mrb[0].mxu0 %v133
  %v284 = vpop.f32.mrb[0].mxu0
  %v285 = vadd.f32 0.0, %v284
  %v286 = vpop.f32.mrb[0].mxu0
  %v287 = vpop.f32.mrb[0].mxu0
  %v288 = vadd.f32 0.0, %v287
  %v289 = vpop.f32.mrb[0].mxu0
  %290 = vmatprep.mubr.bf16.mxu0 0
  %291 = vmatmul.mubr.bf16.gmra.mrb[0].mxu0 %v136
  %v292 = vpop.f32.mrb[0].mxu0
  %v293 = vadd.f32 0.0, %v292
  %v294 = vpop.f32.mrb[0].mxu0
  %v295 = vpop.f32.mrb[0].mxu0
  %v296 = vadd.f32 0.0, %v295
  %v297 = vpop.f32.mrb[0].mxu0
  %298 = vdwg.mxu0
  %v299 = vld [vmem:[%s2] sm:$0xff]
  %v300 = vld [vmem:[%s2 + $0x8] sm:$0xff]
  %v301 = vld [vmem:[%s2 + $0x10] sm:$0xff]
  %v302 = vld [vmem:[%s2 + $0x18] sm:$0xff]
  %vm303 = vcmask 261120
  %v305 = vsel %vm303, %v173, 0
  %v308 = vsel %vm303, %v176, 0
  %v311 = vsel %vm303, %v181, 0
  %v314 = vsel %vm303, %v184, 0
  %v317 = vsel %vm303, %v189, 0
  %v320 = vsel %vm303, %v192, 0
  %v323 = vsel %vm303, %v197, 0
  %v326 = vsel %vm303, %v200, 0
  %v329 = vsel %vm303, %v205, 0
  %v332 = vsel %vm303, %v208, 0
  %v335 = vsel %vm303, %v213, 0
  %v338 = vsel %vm303, %v216, 0
  %v341 = vsel %vm303, %v221, 0
  %v344 = vsel %vm303, %v224, 0
  %v347 = vsel %vm303, %v229, 0
  %v350 = vsel %vm303, %v232, 0
  %v353 = vsel %vm303, %v237, 0
  %v356 = vsel %vm303, %v240, 0
  %v359 = vsel %vm303, %v245, 0
  %v362 = vsel %vm303, %v248, 0
  %v365 = vsel %vm303, %v253, 0
  %v368 = vsel %vm303, %v256, 0
  %v371 = vsel %vm303, %v261, 0
  %v374 = vsel %vm303, %v264, 0
  %v377 = vsel %vm303, %v269, 0
  %v380 = vsel %vm303, %v272, 0
  %v383 = vsel %vm303, %v277, 0
  %v386 = vsel %vm303, %v280, 0
  %v389 = vsel %vm303, %v285, 0
  %v392 = vsel %vm303, %v288, 0
  %v395 = vsel %vm303, %v293, 0
  %v398 = vsel %vm303, %v296, 0
  %400 = vmatprep.subr.mxu0 0.0
  %401 = vmatpush1.msra.mxu0 %v299
  %402 = vmatprep.subr.mxu0 0.0
  %403 = vmatpush1.msra.mxu0 %v300
  %404 = vmatprep.subr.mxu0 0.0
  %405 = vmatpush1.msra.mxu0 %v301
  %406 = vmatprep.subr.mxu0 0.0
  %407 = vmatpush1.msra.mxu0 %v302
  %408 = vmatprep.subr.mxu0 0.0
  %409 = vmatpush1.msra.mxu0 0.0
  %410 = vmatprep.subr.mxu0 0.0
  %411 = vmatpush1.msra.mxu0 0.0
  %412 = vmatprep.subr.mxu0 0.0
  %413 = vmatpush1.msra.mxu0 0.0
  %414 = vmatprep.subr.mxu0 0.0
  %415 = vmatpush1.msra.mxu0 0.0
  %416 = vmatprep.subr.mxu0 0.0
  %417 = vmatpush1.msra.mxu0 0.0
  %418 = vmatprep.subr.mxu0 0.0
  %419 = vmatpush1.msra.mxu0 0.0
  %420 = vmatprep.subr.mxu0 0.0
  %421 = vmatpush1.msra.mxu0 0.0
  %422 = vmatprep.subr.mxu0 0.0
  %423 = vmatpush1.msra.mxu0 0.0
  %424 = vmatprep.subr.mxu0 0.0
  %425 = vmatpush1.msra.mxu0 0.0
  %426 = vmatprep.subr.mxu0 0.0
  %427 = vmatpush1.msra.mxu0 0.0
  %428 = vmatprep.subr.mxu0 0.0
  %429 = vmatpush1.msra.mxu0 0.0
  %430 = vmatprep.subr.mxu0 0.0
  %431 = vmatpush1.msra.mxu0 0.0
  %432 = vmatprep.subr.mxu0 0.0
  %433 = vmatpush1.msra.mxu0 0.0
  %434 = vmatprep.subr.mxu0 0.0
  %435 = vmatpush1.msra.mxu0 0.0
  %436 = vmatprep.subr.mxu0 0.0
  %437 = vmatpush1.msra.mxu0 0.0
  %438 = vmatprep.subr.mxu0 0.0
  %439 = vmatpush1.msra.mxu0 0.0
  %440 = vmatprep.subr.mxu0 0.0
  %441 = vmatpush1.msra.mxu0 0.0
  %442 = vmatprep.subr.mxu0 0.0
  %443 = vmatpush1.msra.mxu0 0.0
  %444 = vmatprep.subr.mxu0 0.0
  %445 = vmatpush1.msra.mxu0 0.0
  %446 = vmatprep.subr.mxu0 0.0
  %447 = vmatpush1.msra.mxu0 0.0
  %448 = vmatprep.subr.mxu0 0.0
  %449 = vmatpush1.msra.mxu0 0.0
  %450 = vmatprep.subr.mxu0 0.0
  %451 = vmatpush1.msra.mxu0 0.0
  %452 = vmatprep.subr.mxu0 0.0
  %453 = vmatpush1.msra.mxu0 0.0
  %454 = vmatprep.subr.mxu0 0.0
  %455 = vmatpush1.msra.mxu0 0.0
  %456 = vmatprep.subr.mxu0 0.0
  %457 = vmatpush1.msra.mxu0 0.0
  %458 = vmatprep.subr.mxu0 0.0
  %459 = vmatpush1.msra.mxu0 0.0
  %460 = vmatprep.subr.mxu0 0.0
  %461 = vmatpush1.msra.mxu0 0.0
  %462 = vmatprep.subr.mxu0 0.0
  %463 = vmatpush1.msra.mxu0 0.0
  %464 = vmatprep.mubr.f32.mxu0 0.0
  %465 = vmatmul.mubr.f32.gmra.mrb[0].mxu0 %v305
  %v466 = vpop.f32.mrb[0].mxu0
  %v467 = vadd.f32 0.0, %v466
  %v468 = vpop.f32.mrb[0].mxu0
  %469 = vmatprep.mubr.f32.mxu0 0.0
  %470 = vmatmul.mubr.f32.gmra.mrb[0].mxu0 %v308
  %v471 = vpop.f32.mrb[0].mxu0
  %v472 = vadd.f32 0.0, %v471
  %v473 = vpop.f32.mrb[0].mxu0
  %474 = vmatprep.mubr.f32.mxu0 0.0
  %475 = vmatmul.mubr.f32.gmra.mrb[0].mxu0 %v311
  %v476 = vpop.f32.mrb[0].mxu0
  %v477 = vadd.f32 0.0, %v476
  %v478 = vpop.f32.mrb[0].mxu0
  %479 = vmatprep.mubr.f32.mxu0 0.0
  %480 = vmatmul.mubr.f32.gmra.mrb[0].mxu0 %v314
  %v481 = vpop.f32.mrb[0].mxu0
  %v482 = vadd.f32 0.0, %v481
  %v483 = vpop.f32.mrb[0].mxu0
  %484 = vmatprep.mubr.f32.mxu0 0.0
  %485 = vmatmul.mubr.f32.gmra.mrb[0].mxu0 %v317
  %v486 = vpop.f32.mrb[0].mxu0
  %v487 = vadd.f32 0.0, %v486
  %v488 = vpop.f32.mrb[0].mxu0
  %489 = vmatprep.mubr.f32.mxu0 0.0
  %490 = vmatmul.mubr.f32.gmra.mrb[0].mxu0 %v320
  %v491 = vpop.f32.mrb[0].mxu0
  %v492 = vadd.f32 0.0, %v491
  %v493 = vpop.f32.mrb[0].mxu0
  %494 = vmatprep.mubr.f32.mxu0 0.0
  %495 = vmatmul.mubr.f32.gmra.mrb[0].mxu0 %v323
  %v496 = vpop.f32.mrb[0].mxu0
  %v497 = vadd.f32 0.0, %v496
  %v498 = vpop.f32.mrb[0].mxu0
  %499 = vmatprep.mubr.f32.mxu0 0.0
  %500 = vmatmul.mubr.f32.gmra.mrb[0].mxu0 %v326
  %v501 = vpop.f32.mrb[0].mxu0
  %v502 = vadd.f32 0.0, %v501
  %v503 = vpop.f32.mrb[0].mxu0
  %504 = vmatprep.mubr.f32.mxu0 0.0
  %505 = vmatmul.mubr.f32.gmra.mrb[0].mxu0 %v329
  %v506 = vpop.f32.mrb[0].mxu0
  %v507 = vadd.f32 0.0, %v506
  %v508 = vpop.f32.mrb[0].mxu0
  %509 = vmatprep.mubr.f32.mxu0 0.0
  %510 = vmatmul.mubr.f32.gmra.mrb[0].mxu0 %v332
  %v511 = vpop.f32.mrb[0].mxu0
  %v512 = vadd.f32 0.0, %v511
  %v513 = vpop.f32.mrb[0].mxu0
  %514 = vmatprep.mubr.f32.mxu0 0.0
  %515 = vmatmul.mubr.f32.gmra.mrb[0].mxu0 %v335
  %v516 = vpop.f32.mrb[0].mxu0
  %v517 = vadd.f32 0.0, %v516
  %v518 = vpop.f32.mrb[0].mxu0
  %519 = vmatprep.mubr.f32.mxu0 0.0
  %520 = vmatmul.mubr.f32.gmra.mrb[0].mxu0 %v338
  %v521 = vpop.f32.mrb[0].mxu0
  %v522 = vadd.f32 0.0, %v521
  %v523 = vpop.f32.mrb[0].mxu0
  %524 = vmatprep.mubr.f32.mxu0 0.0
  %525 = vmatmul.mubr.f32.gmra.mrb[0].mxu0 %v341
  %v526 = vpop.f32.mrb[0].mxu0
  %v527 = vadd.f32 0.0, %v526
  %v528 = vpop.f32.mrb[0].mxu0
  %529 = vmatprep.mubr.f32.mxu0 0.0
  %530 = vmatmul.mubr.f32.gmra.mrb[0].mxu0 %v344
  %v531 = vpop.f32.mrb[0].mxu0
  %v532 = vadd.f32 0.0, %v531
  %v533 = vpop.f32.mrb[0].mxu0
  %534 = vmatprep.mubr.f32.mxu0 0.0
  %535 = vmatmul.mubr.f32.gmra.mrb[0].mxu0 %v347
  %v536 = vpop.f32.mrb[0].mxu0
  %v537 = vadd.f32 0.0, %v536
  %v538 = vpop.f32.mrb[0].mxu0
  %539 = vmatprep.mubr.f32.mxu0 0.0
  %540 = vmatmul.mubr.f32.gmra.mrb[0].mxu0 %v350
  %v541 = vpop.f32.mrb[0].mxu0
  %v542 = vadd.f32 0.0, %v541
  %v543 = vpop.f32.mrb[0].mxu0
  %544 = vmatprep.mubr.f32.mxu0 0.0
  %545 = vmatmul.mubr.f32.gmra.mrb[0].mxu0 %v353
  %v546 = vpop.f32.mrb[0].mxu0
  %v547 = vadd.f32 0.0, %v546
  %v548 = vpop.f32.mrb[0].mxu0
  %549 = vmatprep.mubr.f32.mxu0 0.0
  %550 = vmatmul.mubr.f32.gmra.mrb[0].mxu0 %v356
  %v551 = vpop.f32.mrb[0].mxu0
  %v552 = vadd.f32 0.0, %v551
  %v553 = vpop.f32.mrb[0].mxu0
  %554 = vmatprep.mubr.f32.mxu0 0.0
  %555 = vmatmul.mubr.f32.gmra.mrb[0].mxu0 %v359
  %v556 = vpop.f32.mrb[0].mxu0
  %v557 = vadd.f32 0.0, %v556
  %v558 = vpop.f32.mrb[0].mxu0
  %559 = vmatprep.mubr.f32.mxu0 0.0
  %560 = vmatmul.mubr.f32.gmra.mrb[0].mxu0 %v362
  %v561 = vpop.f32.mrb[0].mxu0
  %v562 = vadd.f32 0.0, %v561
  %v563 = vpop.f32.mrb[0].mxu0
  %564 = vmatprep.mubr.f32.mxu0 0.0
  %565 = vmatmul.mubr.f32.gmra.mrb[0].mxu0 %v365
  %v566 = vpop.f32.mrb[0].mxu0
  %v567 = vadd.f32 0.0, %v566
  %v568 = vpop.f32.mrb[0].mxu0
  %569 = vmatprep.mubr.f32.mxu0 0.0
  %570 = vmatmul.mubr.f32.gmra.mrb[0].mxu0 %v368
  %v571 = vpop.f32.mrb[0].mxu0
  %v572 = vadd.f32 0.0, %v571
  %v573 = vpop.f32.mrb[0].mxu0
  %574 = vmatprep.mubr.f32.mxu0 0.0
  %575 = vmatmul.mubr.f32.gmra.mrb[0].mxu0 %v371
  %v576 = vpop.f32.mrb[0].mxu0
  %v577 = vadd.f32 0.0, %v576
  %v578 = vpop.f32.mrb[0].mxu0
  %579 = vmatprep.mubr.f32.mxu0 0.0
  %580 = vmatmul.mubr.f32.gmra.mrb[0].mxu0 %v374
  %v581 = vpop.f32.mrb[0].mxu0
  %v582 = vadd.f32 0.0, %v581
  %v583 = vpop.f32.mrb[0].mxu0
  %584 = vmatprep.mubr.f32.mxu0 0.0
  %585 = vmatmul.mubr.f32.gmra.mrb[0].mxu0 %v377
  %v586 = vpop.f32.mrb[0].mxu0
  %v587 = vadd.f32 0.0, %v586
  %v588 = vpop.f32.mrb[0].mxu0
  %589 = vmatprep.mubr.f32.mxu0 0.0
  %590 = vmatmul.mubr.f32.gmra.mrb[0].mxu0 %v380
  %v591 = vpop.f32.mrb[0].mxu0
  %v592 = vadd.f32 0.0, %v591
  %v593 = vpop.f32.mrb[0].mxu0
  %594 = vmatprep.mubr.f32.mxu0 0.0
  %595 = vmatmul.mubr.f32.gmra.mrb[0].mxu0 %v383
  %v596 = vpop.f32.mrb[0].mxu0
  %v597 = vadd.f32 0.0, %v596
  %v598 = vpop.f32.mrb[0].mxu0
  %599 = vmatprep.mubr.f32.mxu0 0.0
  %600 = vmatmul.mubr.f32.gmra.mrb[0].mxu0 %v386
  %v601 = vpop.f32.mrb[0].mxu0
  %v602 = vadd.f32 0.0, %v601
  %v603 = vpop.f32.mrb[0].mxu0
  %604 = vmatprep.mubr.f32.mxu0 0.0
  %605 = vmatmul.mubr.f32.gmra.mrb[0].mxu0 %v389
  %v606 = vpop.f32.mrb[0].mxu0
  %v607 = vadd.f32 0.0, %v606
  %v608 = vpop.f32.mrb[0].mxu0
  %609 = vmatprep.mubr.f32.mxu0 0.0
  %610 = vmatmul.mubr.f32.gmra.mrb[0].mxu0 %v392
  %v611 = vpop.f32.mrb[0].mxu0
  %v612 = vadd.f32 0.0, %v611
  %v613 = vpop.f32.mrb[0].mxu0
  %614 = vmatprep.mubr.f32.mxu0 0.0
  %615 = vmatmul.mubr.f32.gmra.mrb[0].mxu0 %v395
  %v616 = vpop.f32.mrb[0].mxu0
  %v617 = vadd.f32 0.0, %v616
  %v618 = vpop.f32.mrb[0].mxu0
  %619 = vmatprep.mubr.f32.mxu0 0.0
  %620 = vmatmul.mubr.f32.gmra.mrb[0].mxu0 %v398
  %v621 = vpop.f32.mrb[0].mxu0
  %v622 = vadd.f32 0.0, %v621
  %v623 = vpop.f32.mrb[0].mxu0
  %624 = vdwg.mxu0
  %vm625 = vcmask 64512
  %626 = vst.msk [vmem:[%s4] sm:$0xff] %vm625, %v467
  %627 = vst.msk [vmem:[%s4 + $0x8] sm:$0xff] %vm625, %v472
  %628 = vst.msk [vmem:[%s4 + $0x10] sm:$0xff] %vm625, %v477
  %629 = vst.msk [vmem:[%s4 + $0x18] sm:$0xff] %vm625, %v482
  %630 = vst.msk [vmem:[%s4 + $0x20] sm:$0xff] %vm625, %v487
  %631 = vst.msk [vmem:[%s4 + $0x28] sm:$0xff] %vm625, %v492
  %632 = vst.msk [vmem:[%s4 + $0x30] sm:$0xff] %vm625, %v497
  %633 = vst.msk [vmem:[%s4 + $0x38] sm:$0xff] %vm625, %v502
  %634 = vst.msk [vmem:[%s4 + $0x40] sm:$0xff] %vm625, %v507
  %635 = vst.msk [vmem:[%s4 + $0x48] sm:$0xff] %vm625, %v512
  %636 = vst.msk [vmem:[%s4 + $0x50] sm:$0xff] %vm625, %v517
  %637 = vst.msk [vmem:[%s4 + $0x58] sm:$0xff] %vm625, %v522
  %638 = vst.msk [vmem:[%s4 + $0x60] sm:$0xff] %vm625, %v527
  %639 = vst.msk [vmem:[%s4 + $0x68] sm:$0xff] %vm625, %v532
  %640 = vst.msk [vmem:[%s4 + $0x70] sm:$0xff] %vm625, %v537
  %641 = vst.msk [vmem:[%s4 + $0x78] sm:$0xff] %vm625, %v542
  %642 = vst.msk [vmem:[%s4 + $0x80] sm:$0xff] %vm625, %v547
  %643 = vst.msk [vmem:[%s4 + $0x88] sm:$0xff] %vm625, %v552
  %644 = vst.msk [vmem:[%s4 + $0x90] sm:$0xff] %vm625, %v557
  %645 = vst.msk [vmem:[%s4 + $0x98] sm:$0xff] %vm625, %v562
  %646 = vst.msk [vmem:[%s4 + $0xa0] sm:$0xff] %vm625, %v567
  %647 = vst.msk [vmem:[%s4 + $0xa8] sm:$0xff] %vm625, %v572
  %648 = vst.msk [vmem:[%s4 + $0xb0] sm:$0xff] %vm625, %v577
  %649 = vst.msk [vmem:[%s4 + $0xb8] sm:$0xff] %vm625, %v582
  %650 = vst.msk [vmem:[%s4 + $0xc0] sm:$0xff] %vm625, %v587
  %651 = vst.msk [vmem:[%s4 + $0xc8] sm:$0xff] %vm625, %v592
  %652 = vst.msk [vmem:[%s4 + $0xd0] sm:$0xff] %vm625, %v597
  %653 = vst.msk [vmem:[%s4 + $0xd8] sm:$0xff] %vm625, %v602
  %654 = vst.msk [vmem:[%s4 + $0xe0] sm:$0xff] %vm625, %v607
  %655 = vst.msk [vmem:[%s4 + $0xe8] sm:$0xff] %vm625, %v612
  %656 = vst.msk [vmem:[%s4 + $0xf0] sm:$0xff] %vm625, %v617
  %657 = vst.msk [vmem:[%s4 + $0xf8] sm:$0xff] %vm625, %v622
  %v658 = vpack.c.bf16 %v176, %v173
  %v659 = vpack.c.bf16 %v184, %v181
  %v660 = vpack.c.bf16 %v192, %v189
  %v661 = vpack.c.bf16 %v200, %v197
  %v662 = vpack.c.bf16 %v208, %v205
  %v663 = vpack.c.bf16 %v216, %v213
  %v664 = vpack.c.bf16 %v224, %v221
  %v665 = vpack.c.bf16 %v232, %v229
  %v666 = vpack.c.bf16 %v240, %v237
  %v667 = vpack.c.bf16 %v248, %v245
  %v668 = vpack.c.bf16 %v256, %v253
  %v669 = vpack.c.bf16 %v264, %v261
  %v670 = vpack.c.bf16 %v272, %v269
  %v671 = vpack.c.bf16 %v280, %v277
  %v672 = vpack.c.bf16 %v288, %v285
  %v673 = vpack.c.bf16 %v296, %v293
  %v690 = vunpack.c.l.b16 %v658
  %v691 = vunpack.c.h.b16 %v658
  %v692 = vunpack.c.l.b16 %v659
  %v693 = vunpack.c.h.b16 %v659
  %v694 = vunpack.c.l.b16 %v660
  %v695 = vunpack.c.h.b16 %v660
  %v696 = vunpack.c.l.b16 %v661
  %v697 = vunpack.c.h.b16 %v661
  %v698 = vunpack.c.l.b16 %v662
  %v699 = vunpack.c.h.b16 %v662
  %v700 = vunpack.c.l.b16 %v663
  %v701 = vunpack.c.h.b16 %v663
  %v702 = vunpack.c.l.b16 %v664
  %v703 = vunpack.c.h.b16 %v664
  %v704 = vunpack.c.l.b16 %v665
  %v705 = vunpack.c.h.b16 %v665
  %v706 = vunpack.c.l.b16 %v666
  %v707 = vunpack.c.h.b16 %v666
  %v708 = vunpack.c.l.b16 %v667
  %v709 = vunpack.c.h.b16 %v667
  %v710 = vunpack.c.l.b16 %v668
  %v711 = vunpack.c.h.b16 %v668
  %v712 = vunpack.c.l.b16 %v669
  %v713 = vunpack.c.h.b16 %v669
  %v714 = vunpack.c.l.b16 %v670
  %v715 = vunpack.c.h.b16 %v670
  %v716 = vunpack.c.l.b16 %v671
  %v717 = vunpack.c.h.b16 %v671
  %v718 = vunpack.c.l.b16 %v672
  %v719 = vunpack.c.h.b16 %v672
  %v720 = vunpack.c.l.b16 %v673
  %v721 = vunpack.c.h.b16 %v673
  %v722 = vpack.c.b16 %v690, %v690
  %v723 = vpack.c.b16 %v691, %v691
  %v724 = vpack.c.b16 %v692, %v692
  %v725 = vpack.c.b16 %v693, %v693
  %v726 = vpack.c.b16 %v694, %v694
  %v727 = vpack.c.b16 %v695, %v695
  %v728 = vpack.c.b16 %v696, %v696
  %v729 = vpack.c.b16 %v697, %v697
  %v730 = vpack.c.b16 %v698, %v698
  %v731 = vpack.c.b16 %v699, %v699
  %v732 = vpack.c.b16 %v700, %v700
  %v733 = vpack.c.b16 %v701, %v701
  %v734 = vpack.c.b16 %v702, %v702
  %v735 = vpack.c.b16 %v703, %v703
  %v736 = vpack.c.b16 %v704, %v704
  %v737 = vpack.c.b16 %v705, %v705
  %v738 = vpack.c.b16 %v706, %v706
  %v739 = vpack.c.b16 %v707, %v707
  %v740 = vpack.c.b16 %v708, %v708
  %v741 = vpack.c.b16 %v709, %v709
  %v742 = vpack.c.b16 %v710, %v710
  %v743 = vpack.c.b16 %v711, %v711
  %v744 = vpack.c.b16 %v712, %v712
  %v745 = vpack.c.b16 %v713, %v713
  %v746 = vpack.c.b16 %v714, %v714
  %v747 = vpack.c.b16 %v715, %v715
  %v748 = vpack.c.b16 %v716, %v716
  %v749 = vpack.c.b16 %v717, %v717
  %v750 = vpack.c.b16 %v718, %v718
  %v751 = vpack.c.b16 %v719, %v719
  %v752 = vpack.c.b16 %v720, %v720
  %v753 = vpack.c.b16 %v721, %v721
  %vm786 = vcmask 257024
  %787 = vst.msk [vmem:[%s3] sm:$0xf] %vm786, %v722
  %788 = vst.msk [vmem:[%s3 + $0x4] sm:$0xf] %vm786, %v723
  %789 = vst.msk [vmem:[%s3 + $0x8] sm:$0xf] %vm786, %v724
  %790 = vst.msk [vmem:[%s3 + $0xc] sm:$0xf] %vm786, %v725
  %791 = vst.msk [vmem:[%s3 + $0x10] sm:$0xf] %vm786, %v726
  %792 = vst.msk [vmem:[%s3 + $0x14] sm:$0xf] %vm786, %v727
  %793 = vst.msk [vmem:[%s3 + $0x18] sm:$0xf] %vm786, %v728
  %794 = vst.msk [vmem:[%s3 + $0x1c] sm:$0xf] %vm786, %v729
  %795 = vst.msk [vmem:[%s3 + $0x20] sm:$0xf] %vm786, %v730
  %796 = vst.msk [vmem:[%s3 + $0x24] sm:$0xf] %vm786, %v731
  %797 = vst.msk [vmem:[%s3 + $0x28] sm:$0xf] %vm786, %v732
  %798 = vst.msk [vmem:[%s3 + $0x2c] sm:$0xf] %vm786, %v733
  %799 = vst.msk [vmem:[%s3 + $0x30] sm:$0xf] %vm786, %v734
  %800 = vst.msk [vmem:[%s3 + $0x34] sm:$0xf] %vm786, %v735
  %801 = vst.msk [vmem:[%s3 + $0x38] sm:$0xf] %vm786, %v736
  %802 = vst.msk [vmem:[%s3 + $0x3c] sm:$0xf] %vm786, %v737
  %803 = vst.msk [vmem:[%s3 + $0x40] sm:$0xf] %vm786, %v738
  %804 = vst.msk [vmem:[%s3 + $0x44] sm:$0xf] %vm786, %v739
  %805 = vst.msk [vmem:[%s3 + $0x48] sm:$0xf] %vm786, %v740
  %806 = vst.msk [vmem:[%s3 + $0x4c] sm:$0xf] %vm786, %v741
  %807 = vst.msk [vmem:[%s3 + $0x50] sm:$0xf] %vm786, %v742
  %808 = vst.msk [vmem:[%s3 + $0x54] sm:$0xf] %vm786, %v743
  %809 = vst.msk [vmem:[%s3 + $0x58] sm:$0xf] %vm786, %v744
  %810 = vst.msk [vmem:[%s3 + $0x5c] sm:$0xf] %vm786, %v745
  %811 = vst.msk [vmem:[%s3 + $0x60] sm:$0xf] %vm786, %v746
  %812 = vst.msk [vmem:[%s3 + $0x64] sm:$0xf] %vm786, %v747
  %813 = vst.msk [vmem:[%s3 + $0x68] sm:$0xf] %vm786, %v748
  %814 = vst.msk [vmem:[%s3 + $0x6c] sm:$0xf] %vm786, %v749
  %815 = vst.msk [vmem:[%s3 + $0x70] sm:$0xf] %vm786, %v750
  %816 = vst.msk [vmem:[%s3 + $0x74] sm:$0xf] %vm786, %v751
  %817 = vst.msk [vmem:[%s3 + $0x78] sm:$0xf] %vm786, %v752
  %818 = vst.msk [vmem:[%s3 + $0x7c] sm:$0xf] %vm786, %v753
  // Predicated region
  $region14: #{tpu_custom_call.1} parent=0 // pred_check
    _
  $region15: #{tpu_custom_call.1} parent=0 // pred_check_branch
    %820 = sbr.rel (0) target = $region17
  $region16: #{tpu_custom_call.1} parent=0 // pred_region
    _
  $region17: #{tpu_custom_call.1} parent=0 // pred_fallthru
    _
  // Predicated region
  $region18: #{tpu_custom_call.1} parent=0 // pred_check
    _
  $region19: #{tpu_custom_call.1} parent=0 // pred_check_branch
    %822 = sbr.rel (0) target = $region21
  $region20: #{tpu_custom_call.1} parent=0 // pred_region
    _
  $region21: #{tpu_custom_call.1} parent=0 // pred_fallthru
    _
  // Predicated region
  $region22: #{tpu_custom_call.1} parent=0 // pred_check
    _
  $region23: #{tpu_custom_call.1} parent=0 // pred_check_branch
    %824 = sbr.rel (0) target = $region25
  $region24: #{tpu_custom_call.1} parent=0 // pred_region
    _
  $region25: #{tpu_custom_call.1} parent=0 // pred_fallthru
    _
  // Predicated region
  $region26: #{tpu_custom_call.1} parent=0 // pred_check
    _
  $region27: #{tpu_custom_call.1} parent=0 // pred_check_branch
    %826 = sbr.rel (0) target = $region29
  $region28: #{tpu_custom_call.1} parent=0 // pred_region
    _
  $region29: #{tpu_custom_call.1} parent=0 // pred_fallthru
    _

</llo_original>
